<compile_context>
chip_gen: v5e
topology: v5e:2x2
jax: 0.10.0
libtpu: 0.0.40
codegen_flags: <defaults>
</compile_context>

<pallas_src>
import functools

import jax
import jax.numpy as jnp
from jax.experimental import pallas as pl
from jax.experimental.pallas import tpu as pltpu


def _vmem_limit_bytes():
    """Generation-aware scoped-VMEM limit: ~70% of physical VMEM, with headroom
    left for Mosaic's internal scratch and the output buffers."""
    default_cap = 128 * 1024 * 1024            # v5e / v6e physical VMEM
    try:
        info = pltpu.get_tpu_info()
        cap = int(getattr(info, "vmem_capacity_bytes", default_cap))
    except Exception:                          # interpret mode / non-TPU fallback
        cap = default_cap
    return max(16 * 1024 * 1024, int(cap * 0.70))


def _choose_tile_b(batch, num_classes, itemsize, vmem_limit):
    """Pick the batch-tile height from the real VMEM footprint of the pipeline.

    Per-row footprint (bytes), dominated by the class axis:
      2 x input tile (double-buffered DMA) : 2 * C * itemsize
      weights + shifted (input dtype)      : 2 * C * itemsize
      f32 exp temporary                    : 4 * C
      i32 class-id iota                    : 4 * C
    """
    per_row = num_classes * (4 * itemsize + 8)
    budget = vmem_limit // 2                   # headroom for Mosaic internal scratch
    sublane_mult = 8 * max(1, 4 // itemsize)   # 8 (f32), 16 (bf16), 32 (int8/fp8)

    if per_row * sublane_mult > budget:
        # TODO(synk): for 100K+-class vocabs add a class-tiled ('arbitrary') grid
        # axis with an online logsumexp accumulator; fail loudly instead of
        # silently overflowing VMEM on v7x (64 MiB physical).
        raise ValueError(
            f"num_classes={num_classes} too large for single-pass class reduce "
            f"(per-row footprint {per_row} B exceeds VMEM budget {budget} B)")

    rows = budget // per_row
    rows = max(sublane_mult, min(int(rows), 32768))
    rows = (rows // sublane_mult) * sublane_mult
    if batch <= rows:
        return batch                           # block dim == full array dim is legal
    return rows


def _ce_label_smoothing_kernel(x_ref, lbl_ref, out_ref, *, epsilon, num_classes,
                               batch, tile_b, ragged):
    # x_ref:   (TILE_B, C) logits block in VMEM (input dtype)
    # lbl_ref: (TILE_B, 1) int32 labels block in VMEM
    # out_ref: (1, 1) f32 per-tile partial sum in SMEM
    x = x_ref[...]                                               # (TILE_B, C)
    labels = lbl_ref[...]                                        # (TILE_B, 1) int32

    # Numerically stable logsumexp over classes; promote to f32 only on the
    # exp / accumulation path.
    m = jnp.max(x, axis=1, keepdims=True)                        # (TILE_B, 1)
    shifted = x - m                                              # input dtype
    sum_exp = jnp.sum(jnp.exp(shifted.astype(jnp.float32)),
                      axis=1, keepdims=True)                     # (TILE_B, 1) f32
    logsumexp = m.astype(jnp.float32) + jnp.log(sum_exp)         # (TILE_B, 1) f32

    # Single weighted lane-reduce replacing one-hot + smoothing + dot:
    #   w_c = eps/C + (1-eps)*[c == target],  sum_c w_c = 1
    #   row_loss = sum_c w_c * (logsumexp - x_c) = logsumexp - sum_c w_c * x_c
    class_ids = jax.lax.broadcasted_iota(jnp.int32, x.shape, 1)
    uniform_w = jnp.asarray(epsilon / num_classes, x.dtype)
    target_w = jnp.asarray(1.0 - epsilon + epsilon / num_classes, x.dtype)
    w = jnp.where(class_ids == labels, target_w, uniform_w)      # input dtype
    weighted = jnp.sum((w * x).astype(jnp.float32),
                       axis=1, keepdims=True)                    # (TILE_B, 1) f32

    row_loss = logsumexp - weighted                              # (TILE_B, 1) f32

    if ragged:
        # Only the final, partially filled tile can contain padded rows; mask them
        # AFTER the arithmetic (where selects the constant 0.0, so garbage/NaN in
        # the padded region cannot propagate). Divisor stays the true B (wrapper).
        row0 = pl.program_id(0) * tile_b
        row_ids = row0 + jax.lax.broadcasted_iota(jnp.int32, row_loss.shape, 0)
        row_loss = jnp.where(row_ids < batch, row_loss, 0.0)

    out_ref[0, 0] = jnp.sum(row_loss)


def cross_entropy_label_smoothing(inputs, targets, *, num_classes, epsilon=0.1,
                                  tile_b=None):
    """inputs: (B, C) float logits; targets: (B,) int labels. Returns scalar f32 loss."""
    B, C = inputs.shape
    assert C == num_classes
    labels = targets.astype(jnp.int32).reshape(B, 1)

    vmem_limit = _vmem_limit_bytes()
    if tile_b is None:
        tile_b = _choose_tile_b(B, C, inputs.dtype.itemsize, vmem_limit)
    tile_b = int(min(tile_b, B))
    num_tiles = pl.cdiv(B, tile_b)
    ragged = (B % tile_b) != 0

    kernel = functools.partial(
        _ce_label_smoothing_kernel,
        epsilon=float(epsilon),
        num_classes=int(num_classes),
        batch=int(B),
        tile_b=int(tile_b),
        ragged=bool(ragged),
    )

    partials = pl.pallas_call(
        kernel,
        out_shape=jax.ShapeDtypeStruct((num_tiles, 1), jnp.float32),
        grid_spec=pltpu.PrefetchScalarGridSpec(
            num_scalar_prefetch=0,
            grid=(num_tiles,),
            in_specs=[
                pl.BlockSpec((tile_b, C), lambda i: (i, 0)),     # logits tile
                pl.BlockSpec((tile_b, 1), lambda i: (i, 0)),     # labels tile
            ],
            out_specs=pl.BlockSpec((1, 1), lambda i: (i, 0),
                                   memory_space=pltpu.MemorySpace.SMEM),
        ),
        compiler_params=pltpu.CompilerParams(
            # Independent per-tile partials: lets Mosaic shard the batch-tile loop
            # across v7x's two TensorCores (no effect on single-TC v5e/v6e).
            dimension_semantics=("parallel",),
            vmem_limit_bytes=vmem_limit,
        ),
    )(inputs, labels)

    # Final reduction in the surrounding graph: sum of per-tile partials / true B.
    return jnp.sum(partials) / jnp.float32(B)


def _reference_loss(inputs, targets, num_classes, epsilon=0.1):
    log_probs = jax.nn.log_softmax(inputs.astype(jnp.float32), axis=1)
    onehot = jax.nn.one_hot(targets, num_classes, dtype=jnp.float32)
    smoothed = (1.0 - epsilon) * onehot + epsilon / num_classes
    return jnp.sum(jnp.mean(-smoothed * log_probs, axis=0))


if __name__ == "__main__":
    num_classes = 32
    epsilon = 0.1

    # Test 1: small aligned case (batch fits a single tile).
    batch = 8
    k_x, k_t = jax.random.split(jax.random.PRNGKey(0))
    inputs = jax.random.normal(k_x, (batch, num_classes), dtype=jnp.float32)
    targets = jax.random.randint(k_t, (batch,), 0, num_classes, dtype=jnp.int32)

    loss = cross_entropy_label_smoothing(
        inputs, targets, num_classes=num_classes, epsilon=epsilon)
    loss = jax.block_until_ready(loss)
    ref = _reference_loss(inputs, targets, num_classes, epsilon)
    assert jnp.allclose(loss, ref, atol=1e-5, rtol=1e-5), (loss, ref)

    # Test 2: ragged last tile (forced small tile) exercises the masked epilogue.
    batch2 = 20
    k_x2, k_t2 = jax.random.split(jax.random.PRNGKey(1))
    inputs2 = jax.random.normal(k_x2, (batch2, num_classes), dtype=jnp.float32)
    targets2 = jax.random.randint(k_t2, (batch2,), 0, num_classes, dtype=jnp.int32)

    loss2 = cross_entropy_label_smoothing(
        inputs2, targets2, num_classes=num_classes, epsilon=epsilon, tile_b=16)
    loss2 = jax.block_until_ready(loss2)
    ref2 = _reference_loss(inputs2, targets2, num_classes, epsilon)
    assert jnp.allclose(loss2, ref2, atol=1e-5, rtol=1e-5), (loss2, ref2)

    print("KERNEL_OK")
</pallas_src>

<mosaic_0001>
module attributes {stable_mosaic.version = 11 : i64} {
  func.func @_ce_label_smoothing_kernel(%arg0: i32, %arg1: memref<8x32xf32, #tpu.memory_space<vmem>>, %arg2: memref<8x1xi32, #tpu.memory_space<vmem>>, %arg3: memref<1x1xf32, #tpu.memory_space<smem>>) attributes {dimension_semantics = [#tpu.dimension_semantics<parallel>], iteration_bounds = array<i64: 1>, scalar_prefetch = 0 : i64, scratch_operands = 0 : i64, tpu.core_type = #tpu.core_type<tc>, window_params = [{transform_indices = @transform_0, window_bounds = array<i64: 8, 32>}, {transform_indices = @transform_1, window_bounds = array<i64: 8, 1>}, {transform_indices = @transform_2, window_bounds = array<i64: 1, 1>}]} {
    %c0 = arith.constant 0 : index
    %c0_0 = arith.constant 0 : index
    %0 = vector.load %arg1[%c0, %c0_0] : memref<8x32xf32, #tpu.memory_space<vmem>>, vector<8x32xf32>
    %c0_1 = arith.constant 0 : index
    %c0_2 = arith.constant 0 : index
    %1 = vector.load %arg2[%c0_1, %c0_2] : memref<8x1xi32, #tpu.memory_space<vmem>>, vector<8x1xi32>
    %cst = arith.constant dense<0xFF800000> : vector<8xf32>
    %2 = vector.multi_reduction <maximumf>, %0, %cst [1] : vector<8x32xf32> to vector<8xf32>
    %3 = vector.shape_cast %2 : vector<8xf32> to vector<8x1xf32>
    %4 = vector.broadcast %3 : vector<8x1xf32> to vector<8x32xf32>
    %5 = arith.subf %0, %4 : vector<8x32xf32>
    %6 = math.exp %5 : vector<8x32xf32>
    %cst_3 = arith.constant dense<0.000000e+00> : vector<8xf32>
    %7 = vector.multi_reduction <add>, %6, %cst_3 [1] : vector<8x32xf32> to vector<8xf32>
    %8 = vector.shape_cast %7 : vector<8xf32> to vector<8x1xf32>
    %9 = math.log %8 : vector<8x1xf32>
    %10 = arith.addf %3, %9 : vector<8x1xf32>
    %11 = tpu.iota {dimensions = array<i32: 1>} : vector<8x32xi32>
    %12 = vector.broadcast %1 : vector<8x1xi32> to vector<8x32xi32>
    %13 = arith.cmpi eq, %11, %12 : vector<8x32xi32>
    %cst_4 = arith.constant 0.903124988 : f32
    %cst_5 = arith.constant 3.125000e-03 : f32
    %14 = vector.broadcast %cst_4 : f32 to vector<8x32xf32>
    %15 = vector.broadcast %cst_5 : f32 to vector<8x32xf32>
    %16 = arith.select %13, %14, %15 : vector<8x32xi1>, vector<8x32xf32>
    %17 = arith.mulf %16, %0 : vector<8x32xf32>
    %cst_6 = arith.constant dense<0.000000e+00> : vector<8xf32>
    %18 = vector.multi_reduction <add>, %17, %cst_6 [1] : vector<8x32xf32> to vector<8xf32>
    %19 = vector.shape_cast %18 : vector<8xf32> to vector<8x1xf32>
    %20 = arith.subf %10, %19 : vector<8x1xf32>
    %21 = vector.shape_cast %20 : vector<8x1xf32> to vector<1x8x1xf32>
    %cst_7 = arith.constant dense<0.000000e+00> : vector<1xf32>
    %22 = vector.multi_reduction <add>, %21, %cst_7 [1, 2] : vector<1x8x1xf32> to vector<1xf32>
    %23 = vector.shape_cast %22 : vector<1xf32> to vector<1x1x1xf32>
    %24 = vector.extract %23[0, 0, 0] : f32 from vector<1x1x1xf32>
    %c0_8 = arith.constant 0 : index
    %c0_9 = arith.constant 0 : index
    %25 = memref.load %arg3[%c0_8, %c0_9] : memref<1x1xf32, #tpu.memory_space<smem>>
    memref.store %24, %arg3[%c0_8, %c0_9] : memref<1x1xf32, #tpu.memory_space<smem>>
    return
  }
  func.func @transform_0(%arg0: i32) -> (i32, i32) {
    %c0_i32 = arith.constant 0 : i32
    %c0_i32_0 = arith.constant 0 : i32
    return %arg0, %c0_i32 : i32, i32
  }
  func.func @transform_1(%arg0: i32) -> (i32, i32) {
    %c0_i32 = arith.constant 0 : i32
    %c0_i32_0 = arith.constant 0 : i32
    return %arg0, %c0_i32 : i32, i32
  }
  func.func @transform_2(%arg0: i32) -> (i32, i32) {
    %c0_i32 = arith.constant 0 : i32
    %c0_i32_0 = arith.constant 0 : i32
    return %arg0, %c0_i32 : i32, i32
  }
}

</mosaic_0001>

<llo_original>
// kernel: tpu_custom_call.1
$region0: #{tpu_custom_call.1}
  #allocation0 [shape = 'u32[]', space=smem, size = 0x4, offset = 0x4, fixed_abs, tag = 'smem constant byte address 0x4 - core index']
  #allocation1 [shape = 'u32[72,128]{1,0:T(1,128)}', space=vmem, size = 0x9000, scoped, tag = 'internal scratch']
  %s0 = inlined_call_operand.vmem [shape: f32[8,32], index: 0, kind: input, shape index: {}]
  %s1 = inlined_call_operand.vmem [shape: s32[8,1], index: 1, kind: input, shape index: {}]
  %s2 = inlined_call_operand.hbm [shape: f32[1,1], index: 2, kind: output, shape index: {}]
  %s3 = sld [smem:[#allocation0]]
  $region18: #{tpu_custom_call.1} parent=0
    _
  %s5 = ssub.s32 1, %s3
  %s6 = scalar_select 0, %s5, %s3
  $region1: #{tpu_custom_call.1} parent=0
    #allocation2 [shape = 'u8[512]{0}', space=smem, size = 0x200, scoped, tag = 'output window, operand 0, single buffered']
    #allocation3 [shape = 's32[1]{0}', space=sflag, size = 0x4, scoped, tag = 'scoped memory for tpu_custom_call.1']
    %7 = vsyncpa [#allocation3], 0
    // Predicated region
    $region2: #{tpu_custom_call.1} parent=1 // pred_check
      _
    $region3: #{tpu_custom_call.1} parent=1 // pred_check_branch
      %9 = sbr.rel (0) target = $region5
    $region4: #{tpu_custom_call.1} parent=1 // pred_region
      _
    $region5: #{tpu_custom_call.1} parent=1 // pred_fallthru
      _
    // Predicated region
    $region6: #{tpu_custom_call.1} parent=1 // pred_check
      _
    $region7: #{tpu_custom_call.1} parent=1 // pred_check_branch
      %11 = sbr.rel (0) target = $region9
    $region8: #{tpu_custom_call.1} parent=1 // pred_region
      _
    $region9: #{tpu_custom_call.1} parent=1 // pred_fallthru
      _
    %v12 = vld [vmem:[%s0] sm:$0xff]
    %v13 = vld [vmem:[%s1] sm:$0xff]
    %vm14 = vcmask 261120
    %v15 = vsel %vm14, %v12, -inf
    %16 = vmax.xlane.f32.xlu0 %v15
    %v17 = vpop.xlane.xlu0 %16
    %v18 = vsub.f32 %v12, %v17
    %v19 = vmul.f32 %v18, 1.442695
    %v20 = vpow.pop %v19
    %v21 = vsel %vm14, %v20, 0.0
    %22 = vadd.xlane.f32.xlu0 %v21
    %v23 = vpop.xlane.xlu0 %22
    %v24 = vlog2.pop %v23
    %v25 = vmul.f32 %v24, 0.6931472
    %v26 = vadd.f32 %v17, %v25
    %v27 = vlaneseq
    %v28 = vand.u32 %v27, 127
    %29 = vset.pattern.permute.xlu0 0
    %30 = vperm.xlu0 %29, %v13
    %v31 = vpop.permute.xlu0 %30
    %vm32 = vcmp.eq.s32.totalorder %v28, %v31
    %v33 = vsel %vm32, 0.903125, 0.003125
    %v34 = vmul.f32 %v33, %v12
    %v35 = vsel %vm14, %v34, 0.0
    %36 = vadd.xlane.f32.xlu0 %v35
    %v37 = vpop.xlane.xlu0 %36
    %v38 = vsub.f32 %v26, %v37
    %vm39 = vcmask 7168
    %v40 = vsel %vm39, %v38, 0.0
    %41 = vadd.xlane.f32.xlu0 %v40
    %v42 = vpop.xlane.xlu0 %41
    %v43 = vrot.slane %v42, 4
    %v44 = vadd.f32 %v42, %v43
    %v45 = vrot.slane %v44, 2
    %v46 = vadd.f32 %v44, %v45
    %v47 = vrot.slane %v46, 1
    %v48 = vadd.f32 %v46, %v47
    %s49 = vtos %v48
    %s50 = scalar_lea.smem [#allocation2], 0
    %51 = sst [smem:[%s50]] %s49
    // Predicated region
    $region10: #{tpu_custom_call.1} parent=1 // pred_check
      _
    $region11: #{tpu_custom_call.1} parent=1 // pred_check_branch
      %53 = sbr.rel (0) target = $region13
    $region12: #{tpu_custom_call.1} parent=1 // pred_region
      %55 = vsyncadd [#allocation3], 0
      %s57 = sshll.u32 %s2, 4
      %s58 = int_to_ptr.hbm [resolvable:$true] %s57
      %60 = dma.smem_to_hbm [#allocation2], 16, %s58, [#allocation3]
    $region13: #{tpu_custom_call.1} parent=1 // pred_fallthru
      _
    // Predicated region
    $region14: #{tpu_custom_call.1} parent=1 // pred_check
      _
    $region15: #{tpu_custom_call.1} parent=1 // pred_check_branch
      %62 = sbr.rel (0) target = $region17
    $region16: #{tpu_custom_call.1} parent=1 // pred_region
      %64 = dma.done [#allocation3], 16
    $region17: #{tpu_custom_call.1} parent=1 // pred_fallthru
      _
    %65 = sfence
    %66 = vsyncpa [#allocation3], 1

</llo_original>
